<compile_context>
chip_gen: v6e
topology: v6e:2x2x1
jax: 0.10.0
libtpu: 0.0.40
codegen_flags: <defaults>
</compile_context>

<pallas_src>
import math
import functools

import jax
import jax.numpy as jnp
from jax.experimental import pallas as pl
from jax.experimental.pallas import tpu as pltpu


# ----------------------------- parameter setup (plain JAX glue) ---------------
def make_positional_encoding_table(max_len: int, d_model: int) -> jnp.ndarray:
    """pe of shape (max_len, 1, d_model), identical to the torch buffer."""
    position = jnp.arange(max_len, dtype=jnp.float32)[:, None]                  # (L, 1)
    div_term = jnp.exp(
        jnp.arange(0, d_model, 2, dtype=jnp.float32) * (-math.log(10000.0) / d_model)
    )                                                                            # (D/2,)
    pe = jnp.zeros((max_len, d_model), dtype=jnp.float32)
    pe = pe.at[:, 0::2].set(jnp.sin(position * div_term))
    pe = pe.at[:, 1::2].set(jnp.cos(position * div_term))
    return pe[:, None, :]                                                        # (L, 1, D)


# ----------------------------- in-kernel PRNG helpers --------------------------
_HASH_C1 = 0x7FEB352D                 # lowbias32 constants
_HASH_C2 = 0x846CA68B - (1 << 32)     # expressed as a signed int32
_GOLDEN = 0x9E3779B9 - (1 << 32)


def _lsr32(x, k):
    """Logical right shift of an int32 array (arithmetic shift + mask of top k bits)."""
    return jnp.right_shift(x, k) & jnp.int32((1 << (32 - k)) - 1)


def _hash32(x):
    """lowbias32 integer hash; uint32 semantics emulated on int32 (wrapping mul)."""
    x = x ^ _lsr32(x, 16)
    x = x * jnp.int32(_HASH_C1)
    x = x ^ _lsr32(x, 15)
    x = x * jnp.int32(_HASH_C2)
    x = x ^ _lsr32(x, 16)
    return x


# ----------------------------- Pallas kernel -----------------------------------
def _posenc_dropout_kernel(seed_ref, x_ref, pe_ref, o_ref, *,
                           dropout_p, train, seq_len, tile_s, d_model):
    # x_ref/o_ref: (1, tile_s, d_model) block of the (batch, seq, d_model) tensor.
    # pe_ref:      (1, tile_s, d_model) window of the positional table (float32).
    y = x_ref[...].astype(jnp.float32) + pe_ref[...]

    if train and dropout_p >= 1.0:
        y = jnp.zeros_like(y)
    elif train and dropout_p > 0.0:
        s_blk = pl.program_id(0)            # seq-tile index
        b_blk = pl.program_id(1)            # batch index
        # Unique element id over the WHOLE (batch, seq, d_model) tensor so every grid
        # step draws an independent dropout mask (no per-tile mask replay).
        row0 = b_blk * seq_len + s_blk * tile_s
        r = jax.lax.broadcasted_iota(jnp.int32, y.shape, 1)
        c = jax.lax.broadcasted_iota(jnp.int32, y.shape, 2)
        gid = (row0 + r) * d_model + c
        # TODO(synk): mask stream is a counter-based hash, not torch's RNG; Bernoulli(p)
        # + inverted 1/(1-p) scaling semantics match, bit-level masks do not.
        state = gid ^ (seed_ref[0] * jnp.int32(_GOLDEN))
        bits = _hash32(_hash32(state))
        u24 = _lsr32(bits, 8)                                   # uniform over [0, 2^24)
        thresh = min(int(round(dropout_p * (1 << 24))), 1 << 24)
        keep = (u24 >= jnp.int32(thresh)).astype(jnp.float32)
        y = y * (keep * jnp.float32(1.0 / (1.0 - dropout_p)))   # fused keep * scale

    o_ref[...] = y.astype(o_ref.dtype)


# ----------------------------- tile sizing --------------------------------------
def _pick_tile_s(seq_len, d_model, itemsize, target_bytes=2 << 20):
    """Largest seq tile (multiple of 8, divides seq_len, ~<=2 MiB/block, <=512 rows)."""
    cap = max(8, (target_bytes // max(1, itemsize * d_model)) // 8 * 8)
    cap = min(cap, 512)
    t = (min(seq_len, cap) // 8) * 8
    while t >= 8:
        if seq_len % t == 0:
            return t
        t -= 8
    return seq_len          # tiny / odd seq_len: single full-length block


# ----------------------------- wrapper -------------------------------------------
def positional_encoding(x, pe, seed, *, dropout_p=0.1, train=True):
    """x: (S, B, D); pe: (max_len, 1, D) float32; seed: int32 array of shape (1,)."""
    S, B, D = x.shape

    # Layout plumbing: (S, B, D) -> (B, S, D) so seq sits on sublanes and d_model on
    # lanes (sublane-full, lane-dense blocks). pe becomes (1, max_len, D).
    x_bsd = jnp.transpose(x, (1, 0, 2))
    pe_t = jnp.transpose(pe, (1, 0, 2))

    tile_s = _pick_tile_s(S, D, jnp.dtype(x.dtype).itemsize)
    num_s_tiles = S // tile_s
    # If the fallback tile isn't a multiple of 8, blocks must equal full dims -> slice
    # pe to exactly S. Otherwise pass the full table and let the BlockSpec window it.
    pe_in = pe_t if tile_s % 8 == 0 else pe_t[:, :S, :]

    kernel = functools.partial(
        _posenc_dropout_kernel,
        dropout_p=float(dropout_p), train=bool(train),
        seq_len=S, tile_s=tile_s, d_model=D,
    )

    out_bsd = pl.pallas_call(
        kernel,
        out_shape=jax.ShapeDtypeStruct((B, S, D), x.dtype),
        grid_spec=pltpu.PrefetchScalarGridSpec(
            num_scalar_prefetch=1,                    # seed -> SMEM
            grid=(num_s_tiles, B),                    # seq tiles outer, batch inner
            in_specs=[
                pl.BlockSpec((1, tile_s, D), lambda s, b, seed: (b, s, 0)),  # x
                pl.BlockSpec((1, tile_s, D), lambda s, b, seed: (0, s, 0)),  # pe (batch-invariant)
            ],
            out_specs=pl.BlockSpec((1, tile_s, D), lambda s, b, seed: (b, s, 0)),
        ),
        compiler_params=pltpu.CompilerParams(
            dimension_semantics=("parallel", "parallel")),
    )(seed, x_bsd, pe_in)

    return jnp.transpose(out_bsd, (1, 0, 2))


# ----------------------------- demo / smoke test ---------------------------------
if __name__ == "__main__":
    SEQ, BATCH, D_MODEL, MAX_LEN = 32, 4, 128, 64
    DROPOUT_P = 0.1

    key = jax.random.PRNGKey(0)
    x = jax.random.normal(key, (SEQ, BATCH, D_MODEL), dtype=jnp.float32)
    pe = make_positional_encoding_table(MAX_LEN, D_MODEL)
    seed = jnp.array([12345], dtype=jnp.int32)

    # Training-mode forward (with dropout).
    out_train = jax.block_until_ready(
        positional_encoding(x, pe, seed, dropout_p=DROPOUT_P, train=True))

    # Eval-mode forward (pure x + pe) — check against plain-JAX reference.
    out_eval = jax.block_until_ready(
        positional_encoding(x, pe, seed, dropout_p=DROPOUT_P, train=False))

    ref = x + pe[:SEQ]
    assert out_train.shape == (SEQ, BATCH, D_MODEL)
    assert jnp.allclose(out_eval, ref, atol=1e-5, rtol=1e-5), "eval-mode mismatch vs reference"

    # Train-mode: every element is either 0 (dropped) or (x+pe)/(1-p) (kept).
    scaled = ref / (1.0 - DROPOUT_P)
    is_kept = jnp.isclose(out_train, scaled, atol=1e-5, rtol=1e-5)
    is_dropped = out_train == 0.0
    assert bool(jnp.all(is_kept | is_dropped)), "train-mode values must be 0 or scaled(x+pe)"
    drop_frac = float(jnp.mean(is_dropped.astype(jnp.float32)))
    assert 0.01 < drop_frac < 0.5, f"dropout fraction {drop_frac} out of expected range"

    print("KERNEL_OK")
</pallas_src>

<mosaic_0001>
module attributes {stable_mosaic.version = 11 : i64} {
  func.func @_posenc_dropout_kernel(%arg0: i32, %arg1: i32, %arg2: memref<1xi32, #tpu.memory_space<smem>>, %arg3: memref<1x32x128xf32, #tpu.memory_space<vmem>>, %arg4: memref<1x32x128xf32, #tpu.memory_space<vmem>>, %arg5: memref<1x32x128xf32, #tpu.memory_space<vmem>>) attributes {dimension_semantics = [#tpu.dimension_semantics<parallel>, #tpu.dimension_semantics<parallel>], iteration_bounds = array<i64: 1, 4>, scalar_prefetch = 1 : i64, scratch_operands = 0 : i64, tpu.core_type = #tpu.core_type<tc>, window_params = [{transform_indices = @transform_0, window_bounds = array<i64: 1, 32, 128>}, {transform_indices = @transform_1, window_bounds = array<i64: 1, 32, 128>}, {transform_indices = @transform_2, window_bounds = array<i64: 1, 32, 128>}]} {
    %c0 = arith.constant 0 : index
    %c0_0 = arith.constant 0 : index
    %c0_1 = arith.constant 0 : index
    %0 = vector.load %arg3[%c0, %c0_0, %c0_1] : memref<1x32x128xf32, #tpu.memory_space<vmem>>, vector<1x32x128xf32>
    %c0_2 = arith.constant 0 : index
    %c0_3 = arith.constant 0 : index
    %c0_4 = arith.constant 0 : index
    %1 = vector.load %arg4[%c0_2, %c0_3, %c0_4] : memref<1x32x128xf32, #tpu.memory_space<vmem>>, vector<1x32x128xf32>
    %2 = arith.addf %0, %1 : vector<1x32x128xf32>
    %c32_i32 = arith.constant 32 : i32
    %3 = arith.muli %arg1, %c32_i32 : i32
    %c32_i32_5 = arith.constant 32 : i32
    %4 = arith.muli %arg0, %c32_i32_5 : i32
    %5 = arith.addi %3, %4 : i32
    %6 = tpu.iota {dimensions = array<i32: 1>} : vector<1x32x128xi32>
    %7 = tpu.iota {dimensions = array<i32: 2>} : vector<1x32x128xi32>
    %8 = vector.broadcast %5 : i32 to vector<1x32x128xi32>
    %9 = arith.addi %8, %6 : vector<1x32x128xi32>
    %c128_i32 = arith.constant 128 : i32
    %10 = vector.broadcast %c128_i32 : i32 to vector<1x32x128xi32>
    %11 = arith.muli %9, %10 : vector<1x32x128xi32>
    %12 = arith.addi %11, %7 : vector<1x32x128xi32>
    %c0_6 = arith.constant 0 : index
    %13 = memref.load %arg2[%c0_6] : memref<1xi32, #tpu.memory_space<smem>>
    %c-1640531527_i32 = arith.constant -1640531527 : i32
    %14 = arith.muli %13, %c-1640531527_i32 : i32
    %15 = vector.broadcast %14 : i32 to vector<1x32x128xi32>
    %16 = arith.xori %12, %15 : vector<1x32x128xi32>
    %c16_i32 = arith.constant 16 : i32
    %17 = vector.broadcast %c16_i32 : i32 to vector<1x32x128xi32>
    %18 = arith.shrsi %16, %17 : vector<1x32x128xi32>
    %c65535_i32 = arith.constant 65535 : i32
    %19 = vector.broadcast %c65535_i32 : i32 to vector<1x32x128xi32>
    %20 = arith.andi %18, %19 : vector<1x32x128xi32>
    %21 = arith.xori %16, %20 : vector<1x32x128xi32>
    %c2146121005_i32 = arith.constant 2146121005 : i32
    %22 = vector.broadcast %c2146121005_i32 : i32 to vector<1x32x128xi32>
    %23 = arith.muli %21, %22 : vector<1x32x128xi32>
    %c15_i32 = arith.constant 15 : i32
    %24 = vector.broadcast %c15_i32 : i32 to vector<1x32x128xi32>
    %25 = arith.shrsi %23, %24 : vector<1x32x128xi32>
    %c131071_i32 = arith.constant 131071 : i32
    %26 = vector.broadcast %c131071_i32 : i32 to vector<1x32x128xi32>
    %27 = arith.andi %25, %26 : vector<1x32x128xi32>
    %28 = arith.xori %23, %27 : vector<1x32x128xi32>
    %c-2073254261_i32 = arith.constant -2073254261 : i32
    %29 = vector.broadcast %c-2073254261_i32 : i32 to vector<1x32x128xi32>
    %30 = arith.muli %28, %29 : vector<1x32x128xi32>
    %c16_i32_7 = arith.constant 16 : i32
    %31 = vector.broadcast %c16_i32_7 : i32 to vector<1x32x128xi32>
    %32 = arith.shrsi %30, %31 : vector<1x32x128xi32>
    %c65535_i32_8 = arith.constant 65535 : i32
    %33 = vector.broadcast %c65535_i32_8 : i32 to vector<1x32x128xi32>
    %34 = arith.andi %32, %33 : vector<1x32x128xi32>
    %35 = arith.xori %30, %34 : vector<1x32x128xi32>
    %c16_i32_9 = arith.constant 16 : i32
    %36 = vector.broadcast %c16_i32_9 : i32 to vector<1x32x128xi32>
    %37 = arith.shrsi %35, %36 : vector<1x32x128xi32>
    %c65535_i32_10 = arith.constant 65535 : i32
    %38 = vector.broadcast %c65535_i32_10 : i32 to vector<1x32x128xi32>
    %39 = arith.andi %37, %38 : vector<1x32x128xi32>
    %40 = arith.xori %35, %39 : vector<1x32x128xi32>
    %c2146121005_i32_11 = arith.constant 2146121005 : i32
    %41 = vector.broadcast %c2146121005_i32_11 : i32 to vector<1x32x128xi32>
    %42 = arith.muli %40, %41 : vector<1x32x128xi32>
    %c15_i32_12 = arith.constant 15 : i32
    %43 = vector.broadcast %c15_i32_12 : i32 to vector<1x32x128xi32>
    %44 = arith.shrsi %42, %43 : vector<1x32x128xi32>
    %c131071_i32_13 = arith.constant 131071 : i32
    %45 = vector.broadcast %c131071_i32_13 : i32 to vector<1x32x128xi32>
    %46 = arith.andi %44, %45 : vector<1x32x128xi32>
    %47 = arith.xori %42, %46 : vector<1x32x128xi32>
    %c-2073254261_i32_14 = arith.constant -2073254261 : i32
    %48 = vector.broadcast %c-2073254261_i32_14 : i32 to vector<1x32x128xi32>
    %49 = arith.muli %47, %48 : vector<1x32x128xi32>
    %c16_i32_15 = arith.constant 16 : i32
    %50 = vector.broadcast %c16_i32_15 : i32 to vector<1x32x128xi32>
    %51 = arith.shrsi %49, %50 : vector<1x32x128xi32>
    %c65535_i32_16 = arith.constant 65535 : i32
    %52 = vector.broadcast %c65535_i32_16 : i32 to vector<1x32x128xi32>
    %53 = arith.andi %51, %52 : vector<1x32x128xi32>
    %54 = arith.xori %49, %53 : vector<1x32x128xi32>
    %c8_i32 = arith.constant 8 : i32
    %55 = vector.broadcast %c8_i32 : i32 to vector<1x32x128xi32>
    %56 = arith.shrsi %54, %55 : vector<1x32x128xi32>
    %c16777215_i32 = arith.constant 16777215 : i32
    %57 = vector.broadcast %c16777215_i32 : i32 to vector<1x32x128xi32>
    %58 = arith.andi %56, %57 : vector<1x32x128xi32>
    %c1677722_i32 = arith.constant 1677722 : i32
    %59 = vector.broadcast %c1677722_i32 : i32 to vector<1x32x128xi32>
    %60 = arith.cmpi sge, %58, %59 : vector<1x32x128xi32>
    %61 = arith.extui %60 : vector<1x32x128xi1> to vector<1x32x128xi32>
    %62 = arith.sitofp %61 : vector<1x32x128xi32> to vector<1x32x128xf32>
    %cst = arith.constant 1.11111116 : f32
    %63 = vector.broadcast %cst : f32 to vector<1x32x128xf32>
    %64 = arith.mulf %62, %63 : vector<1x32x128xf32>
    %65 = arith.mulf %2, %64 : vector<1x32x128xf32>
    %c0_17 = arith.constant 0 : index
    %c0_18 = arith.constant 0 : index
    %c0_19 = arith.constant 0 : index
    %66 = vector.load %arg5[%c0_17, %c0_18, %c0_19] : memref<1x32x128xf32, #tpu.memory_space<vmem>>, vector<1x32x128xf32>
    tpu.vector_store %arg5[%c0_17, %c0_18, %c0_19], %65 {strides = array<i32>} : memref<1x32x128xf32, #tpu.memory_space<vmem>>, vector<1x32x128xf32>,
    return
  }
  func.func @transform_0(%arg0: i32, %arg1: i32, %arg2: memref<1xi32, #tpu.memory_space<smem>>) -> (i32, i32, i32) {
    %c0_i32 = arith.constant 0 : i32
    %c0_i32_0 = arith.constant 0 : i32
    return %arg1, %arg0, %c0_i32 : i32, i32, i32
  }
  func.func @transform_1(%arg0: i32, %arg1: i32, %arg2: memref<1xi32, #tpu.memory_space<smem>>) -> (i32, i32, i32) {
    %c0_i32 = arith.constant 0 : i32
    %c0_i32_0 = arith.constant 0 : i32
    %c0_i32_1 = arith.constant 0 : i32
    return %c0_i32, %arg0, %c0_i32_0 : i32, i32, i32
  }
  func.func @transform_2(%arg0: i32, %arg1: i32, %arg2: memref<1xi32, #tpu.memory_space<smem>>) -> (i32, i32, i32) {
    %c0_i32 = arith.constant 0 : i32
    %c0_i32_0 = arith.constant 0 : i32
    return %arg1, %arg0, %c0_i32 : i32, i32, i32
  }
}

</mosaic_0001>

<llo_original>
// kernel: tpu_custom_call.1
$region0: #{tpu_custom_call.1}
  #allocation0 [shape = 'u32[]', space=smem, size = 0x4, offset = 0x4, fixed_abs, tag = 'smem constant byte address 0x4 - core index']
  #allocation1 [shape = 'u32[144,128]{1,0:T(1,128)}', space=vmem, size = 0x12000, scoped, tag = 'internal scratch']
  #allocation2 [shape = 's32[1]{0}', space=sflag, size = 0x4, scoped, tag = 'scoped memory for tpu_custom_call.1']
  #allocation3 [shape = 's32[1]{0:T(128)S(6)}', space=smem, size = 0x200, scoped, tag = 'prefetched SMEM operand 0']
  %s0 = inlined_call_operand.<no memory space> [shape: s32[1], index: 0, kind: input, shape index: {}]
  %s1 = inlined_call_operand.hbm [shape: f32[4,32,128], index: 1, kind: input, shape index: {}]
  %s2 = inlined_call_operand.hbm [shape: f32[1,64,128], index: 2, kind: input, shape index: {}]
  %s3 = inlined_call_operand.hbm [shape: f32[4,32,128], index: 3, kind: output, shape index: {}]
  %s4 = sld [smem:[#allocation0]]
  $region49: #{tpu_custom_call.1} parent=0
    _
  %s6 = ssub.s32 1, %s4
  %s7 = scalar_select 0, %s6, %s4
  %8 = sst [smem:[#allocation3]] %s0
  $region1: #{tpu_custom_call.1} parent=0
    #allocation4 [shape = 'u8[32768]{0}', space=vmem, size = 0x8000, scoped, tag = 'input window, operand 1']
    #allocation5 [shape = 's32[2]{0}', space=sflag, size = 0x8, scoped, tag = 'scoped memory for tpu_custom_call.1']
    #allocation6 [shape = 's32[2]{0}', space=sflag, size = 0x8, scoped, tag = 'scoped memory for tpu_custom_call.1']
    #allocation7 [shape = 'u8[16384]{0}', space=vmem, size = 0x4000, scoped, tag = 'input window, operand 2, single buffered']
    #allocation8 [shape = 's32[1]{0}', space=sflag, size = 0x4, scoped, tag = 'scoped memory for tpu_custom_call.1']
    #allocation9 [shape = 'u8[32768]{0}', space=vmem, size = 0x8000, scoped, tag = 'output window, operand 0']
    %9 = vsyncpa [#allocation5], 0
    %s10 = scalar_lea.sflag [#allocation5], 1
    %11 = vsyncpa %s10, 0
    %12 = vsyncpa [#allocation8], 0
    %13 = vsyncpa [#allocation6], 0
    %s14 = scalar_lea.sflag [#allocation6], 1
    %15 = vsyncpa %s14, 0
    loop: start=0, step=1, limit=6
    $region2: #{tpu_custom_call.1} parent=1 // loop_pre_header
      _
    $region3: #{tpu_custom_call.1} parent=1 // loop_header
      %s17 = sphi 0, %s21
      %p18 = scmp.ge.s32.totalorder %s17, 6
      %s24 = sphi 0, %s36
      %s25 = sphi 0, %s32
      %s26 = sphi 0, %s24
      %s27 = sphi 0, %s25
      %s28 = sphi 0, %s26
      %s29 = sphi 0, %s27
      %s41 = sphi 0, %s43
      %s44 = sphi 0, %s41
      %s45 = sphi 0, %s44
      %s61 = sphi 0, %s45
      %s67 = sphi 0, %s69
      %s70 = sphi 0, %s67
      %s71 = sphi 0, %s70
      %s87 = sphi 0, %s71
      %s95 = sphi 0, %s97
      %s98 = sphi 0, %s95
      %s99 = sphi 0, %s98
      %s115 = sphi 0, %s99
    $region4: #{tpu_custom_call.1} parent=1 // loop_header_branch
      %20 = sbr.rel (%p18) target = $region8
    $region5: #{tpu_custom_call.1} parent=1 // loop_body
      %s22 = ssub.s32 %s17, 1
      %s23 = ssub.s32 %s17, 2
      %s30 = sadd.s32 1, %s25
      %p31 = scmp.ge.s32.totalorder %s30, 4
      %s32 = scalar_select %p31, 0, %s30
      %s33 = sadd.s32 1, %s24
      %s34 = scalar_select %p31, %s33, %s24
      %p35 = scmp.ge.s32.totalorder %s34, 1
      %s36 = scalar_select %p35, 0, %s34
      %s37 = ssub.s32 %s25, %s32
      %s38 = ssub.s32 %s24, %s36
      %s39 = sor.u32 %s37, %s38
      %p40 = scmp.eq.s32.totalorder %s39, 0
      %s42 = sadd.s32 %s41, 1
      %s43 = scalar_select %p40, %s41, %s42
      %p46 = pneg %p40
      %p47 = scmp.eq.s32.totalorder %s17, 3
      %p48 = por %p46, %p47
      %p49 = scmp.ne.s32.totalorder %s41, %s44
      %p50 = scmp.eq.s32.totalorder %s17, 0
      %p51 = por %p49, %p50
      %p52 = scmp.ne.s32.totalorder %s41, %s44
      %p53 = scmp.eq.s32.totalorder %s22, 3
      %p54 = por %p52, %p53
      %p55 = scmp.ne.s32.totalorder %s44, %s45
      %p56 = scmp.eq.s32.totalorder %s22, 0
      %p57 = por %p55, %p56
      %p58 = scmp.ne.s32.totalorder %s44, %s45
      %p59 = scmp.eq.s32.totalorder %s23, 3
      %p60 = por %p58, %p59
      %p62 = scmp.ne.s32.totalorder %s45, %s61
      %p63 = scmp.eq.s32.totalorder %s23, 0
      %p64 = por %p62, %p63
      %s65 = ssub.s32 %s24, %s36
      %p66 = scmp.eq.s32.totalorder %s65, 0
      %s68 = sadd.s32 %s67, 1
      %s69 = scalar_select %p66, %s67, %s68
      %p72 = pneg %p66
      %p73 = scmp.eq.s32.totalorder %s17, 3
      %p74 = por %p72, %p73
      %p75 = scmp.ne.s32.totalorder %s67, %s70
      %p76 = scmp.eq.s32.totalorder %s17, 0
      %p77 = por %p75, %p76
      %p78 = scmp.ne.s32.totalorder %s67, %s70
      %p79 = scmp.eq.s32.totalorder %s22, 3
      %p80 = por %p78, %p79
      %p81 = scmp.ne.s32.totalorder %s70, %s71
      %p82 = scmp.eq.s32.totalorder %s22, 0
      %p83 = por %p81, %p82
      %p84 = scmp.ne.s32.totalorder %s70, %s71
      %p85 = scmp.eq.s32.totalorder %s23, 3
      %p86 = por %p84, %p85
      %p88 = scmp.ne.s32.totalorder %s71, %s87
      %p89 = scmp.eq.s32.totalorder %s23, 0
      %p90 = por %p88, %p89
      %s91 = ssub.s32 %s25, %s32
      %s92 = ssub.s32 %s24, %s36
      %s93 = sor.u32 %s91, %s92
      %p94 = scmp.eq.s32.totalorder %s93, 0
      %s96 = sadd.s32 %s95, 1
      %s97 = scalar_select %p94, %s95, %s96
      %p100 = pneg %p94
      %p101 = scmp.eq.s32.totalorder %s17, 3
      %p102 = por %p100, %p101
      %p103 = scmp.ne.s32.totalorder %s95, %s98
      %p104 = scmp.eq.s32.totalorder %s17, 0
      %p105 = por %p103, %p104
      %p106 = scmp.ne.s32.totalorder %s95, %s98
      %p107 = scmp.eq.s32.totalorder %s22, 3
      %p108 = por %p106, %p107
      %p109 = scmp.ne.s32.totalorder %s98, %s99
      %p110 = scmp.eq.s32.totalorder %s22, 0
      %p111 = por %p109, %p110
      %p112 = scmp.ne.s32.totalorder %s98, %s99
      %p113 = scmp.eq.s32.totalorder %s23, 3
      %p114 = por %p112, %p113
      %p116 = scmp.ne.s32.totalorder %s99, %s115
      %p117 = scmp.eq.s32.totalorder %s23, 0
      %p118 = por %p116, %p117
      %p119 = scmp.le.s32.totalorder 1, %s17
      %p120 = scmp.lt.s32.totalorder %s17, 5
      %p121 = pnand %p119, %p120
      %p122 = pneg %p121
      // Predicated region
      $region9: #{tpu_custom_call.1} parent=5 // pred_check
        _
      $region10: #{tpu_custom_call.1} parent=5 // pred_check_branch
        %124 = sbr.rel (%p121) target = $region12
      $region11: #{tpu_custom_call.1} parent=5 // pred_region
        %s125 = ssub.s32 %s17, 1
        // Predicated region
        $region13: #{tpu_custom_call.1} parent=11 // pred_check
          %p126 = pneg %p83
        $region14: #{tpu_custom_call.1} parent=11 // pred_check_branch
          %128 = sbr.rel (%p126) target = $region16
        $region15: #{tpu_custom_call.1} parent=11 // pred_region
          %s129 = smul.u32 4, %s26
          %s131 = ssub.s32 512, 512
          %132 = vsyncadd [#allocation8], %s131
          %s133 = smul.addr %s129, 128
          %s134 = scalar_lea.hbm %s2, %s133
          %s135 = sshll.u32 [#allocation7], 4
          %s136 = int_to_ptr.vmem [resolvable:$true] %s135
          %141 = dma.hbm_to_vmem [thread:$0]  %s134, 512, %s136, [#allocation8], 128, 128, 8
        $region16: #{tpu_custom_call.1} parent=11 // pred_fallthru
          _
      $region12: #{tpu_custom_call.1} parent=5 // pred_fallthru
        _
      %p142 = scmp.lt.s32.totalorder %s17, 4
      // Predicated region
      $region17: #{tpu_custom_call.1} parent=5 // pred_check
        %p143 = pneg %p142
      $region18: #{tpu_custom_call.1} parent=5 // pred_check_branch
        %145 = sbr.rel (%p143) target = $region20
      $region19: #{tpu_custom_call.1} parent=5 // pred_region
        // Predicated region
        $region21: #{tpu_custom_call.1} parent=19 // pred_check
          %p146 = pneg %p51
        $region22: #{tpu_custom_call.1} parent=19 // pred_check_branch
          %148 = sbr.rel (%p146) target = $region24
        $region23: #{tpu_custom_call.1} parent=19 // pred_region
          %s149 = sand.u32 %s41, 1
          %s150 = scalar_lea.sflag [#allocation5], %s149
          %s151 = sand.u32 %s41, 1
          %s152 = smul.addr %s151, 32
          %s153 = scalar_lea.vmem [#allocation4], %s152
          %s154 = smul.u32 4, %s24
          %s156 = ssub.s32 512, 512
          %157 = vsyncadd %s150, %s156
          %s158 = smul.addr %s25, 4
          %s159 = sadd.s32 %s154, %s158
          %s160 = smul.addr %s159, 128
          %s161 = scalar_lea.hbm %s1, %s160
          %s162 = sshll.u32 %s153, 4
          %s163 = int_to_ptr.vmem [resolvable:$true] %s162
          %168 = dma.hbm_to_vmem [thread:$0]  %s161, 512, %s163, %s150, 128, 128, 8
        $region24: #{tpu_custom_call.1} parent=19 // pred_fallthru
          _
      $region20: #{tpu_custom_call.1} parent=5 // pred_fallthru
        _
      %p169 = scmp.le.s32.totalorder 1, %s17
      %p170 = scmp.lt.s32.totalorder %s17, 5
      %p171 = pnand %p169, %p170
      %p172 = pneg %p171
      // Predicated region
      $region25: #{tpu_custom_call.1} parent=5 // pred_check
        _
      $region26: #{tpu_custom_call.1} parent=5 // pred_check_branch
        %174 = sbr.rel (%p171) target = $region28
      $region27: #{tpu_custom_call.1} parent=5 // pred_region
        %s175 = ssub.s32 %s17, 1
        %s176 = sand.u32 %s44, 1
        %s177 = scalar_lea.sflag [#allocation5], %s176
        %s178 = sand.u32 %s44, 1
        %s179 = smul.addr %s178, 32
        %s180 = scalar_lea.vmem [#allocation4], %s179
        // Predicated region
        $region29: #{tpu_custom_call.1} parent=27 // pred_check
          %p181 = pneg %p57
        $region30: #{tpu_custom_call.1} parent=27 // pred_check_branch
          %183 = sbr.rel (%p181) target = $region32
        $region31: #{tpu_custom_call.1} parent=27 // pred_region
          %184 = dma.done %s177, 512
        $region32: #{tpu_custom_call.1} parent=27 // pred_fallthru
          _
        // Predicated region
        $region33: #{tpu_custom_call.1} parent=27 // pred_check
          %p185 = pneg %p83
        $region34: #{tpu_custom_call.1} parent=27 // pred_check_branch
          %187 = sbr.rel (%p185) target = $region36
        $region35: #{tpu_custom_call.1} parent=27 // pred_region
          %188 = dma.done [#allocation8], 512
        $region36: #{tpu_custom_call.1} parent=27 // pred_fallthru
          _
        %s189 = sand.u32 %s44, 1
        %s190 = scalar_lea.sflag [#allocation5], %s189
        %s191 = sand.u32 %s44, 1
        %s192 = smul.addr %s191, 32
        %s193 = scalar_lea.vmem [#allocation4], %s192
        %p194 = pneg %p57
        %p195 = pneg %p54
        %p196 = pneg %p83
        %p197 = pneg %p80
        %p198 = pneg %p111
        %p199 = pneg %p108
        %s200 = sand.u32 %s98, 1
        %s201 = scalar_lea.sflag [#allocation6], %s200
        %s202 = sand.u32 %s98, 1
        %s203 = smul.addr %s202, 32
        %s204 = scalar_lea.vmem [#allocation9], %s203
        %s205 = smul.u32 4, %s26
        %s206 = smul.u32 4, %s26
        %s207 = smul.u32 4, %s26
        %v208 = vld [vmem:[%s180] sm:$0xff]
        %v209 = vld [vmem:[%s180 + $0x8] sm:$0xff]
        %v210 = vld [vmem:[%s180 + $0x10] sm:$0xff]
        %v211 = vld [vmem:[%s180 + $0x18] sm:$0xff]
        %v212 = vld [vmem:[#allocation7] sm:$0xff]
        %v213 = vld [vmem:[#allocation7 + $0x8] sm:$0xff]
        %v214 = vld [vmem:[#allocation7 + $0x10] sm:$0xff]
        %v215 = vld [vmem:[#allocation7 + $0x18] sm:$0xff]
        %v216 = vadd.f32 %v208, %v212
        %v217 = vadd.f32 %v209, %v213
        %v218 = vadd.f32 %v210, %v214
        %v219 = vadd.f32 %v211, %v215
        %s220 = smul.u32 %s27, 32
        %s221 = smul.u32 %s26, 32
        %s222 = sadd.s32 %s220, %s221
        %v223 = vlaneseq
        %v224 = vshrl.u32 %v223, 7
        %v225 = vadd.s32 %v224, 8
        %v226 = vadd.s32 %v224, 16
        %v227 = vadd.s32 %v224, 24
        %v228 = vlaneseq
        %v229 = vand.u32 %v228, 127
        %v230 = vstv %s222
        %v231 = vadd.s32 %v230, %v224
        %v232 = vadd.s32 %v230, %v225
        %v233 = vadd.s32 %v230, %v226
        %v234 = vadd.s32 %v230, %v227
        %v235 = vmul.u32 %v231, 128
        %v236 = vmul.u32 %v232, 128
        %v237 = vmul.u32 %v233, 128
        %v238 = vmul.u32 %v234, 128
        %v239 = vadd.s32 %v235, %v229
        %v240 = vadd.s32 %v236, %v229
        %v241 = vadd.s32 %v237, %v229
        %v242 = vadd.s32 %v238, %v229
        %s243 = sld [smem:[#allocation3]]
        %s244 = smul.u32 %s243, 2654435769
        %v245 = vstv %s244
        %v246 = vxor.u32 %v239, %v245
        %v247 = vxor.u32 %v240, %v245
        %v248 = vxor.u32 %v241, %v245
        %v249 = vxor.u32 %v242, %v245
        %v250 = vshra.s32 %v246, 16
        %v251 = vshra.s32 %v247, 16
        %v252 = vshra.s32 %v248, 16
        %v253 = vshra.s32 %v249, 16
        %v254 = vand.u32 %v250, 65535
        %v255 = vand.u32 %v251, 65535
        %v256 = vand.u32 %v252, 65535
        %v257 = vand.u32 %v253, 65535
        %v258 = vxor.u32 %v246, %v254
        %v259 = vxor.u32 %v247, %v255
        %v260 = vxor.u32 %v248, %v256
        %v261 = vxor.u32 %v249, %v257
        %v262 = vmul.u32 %v258, 2146121005
        %v263 = vmul.u32 %v259, 2146121005
        %v264 = vmul.u32 %v260, 2146121005
        %v265 = vmul.u32 %v261, 2146121005
        %v266 = vshra.s32 %v262, 15
        %v267 = vshra.s32 %v263, 15
        %v268 = vshra.s32 %v264, 15
        %v269 = vshra.s32 %v265, 15
        %v270 = vand.u32 %v266, 131071
        %v271 = vand.u32 %v267, 131071
        %v272 = vand.u32 %v268, 131071
        %v273 = vand.u32 %v269, 131071
        %v274 = vxor.u32 %v262, %v270
        %v275 = vxor.u32 %v263, %v271
        %v276 = vxor.u32 %v264, %v272
        %v277 = vxor.u32 %v265, %v273
        %v278 = vmul.u32 %v274, 2221713035
        %v279 = vmul.u32 %v275, 2221713035
        %v280 = vmul.u32 %v276, 2221713035
        %v281 = vmul.u32 %v277, 2221713035
        %v282 = vshra.s32 %v278, 16
        %v283 = vshra.s32 %v279, 16
        %v284 = vshra.s32 %v280, 16
        %v285 = vshra.s32 %v281, 16
        %v286 = vand.u32 %v282, 65535
        %v287 = vand.u32 %v283, 65535
        %v288 = vand.u32 %v284, 65535
        %v289 = vand.u32 %v285, 65535
        %v290 = vxor.u32 %v278, %v286
        %v291 = vxor.u32 %v279, %v287
        %v292 = vxor.u32 %v280, %v288
        %v293 = vxor.u32 %v281, %v289
        %v294 = vshra.s32 %v290, 16
        %v295 = vshra.s32 %v291, 16
        %v296 = vshra.s32 %v292, 16
        %v297 = vshra.s32 %v293, 16
        %v298 = vand.u32 %v294, 65535
        %v299 = vand.u32 %v295, 65535
        %v300 = vand.u32 %v296, 65535
        %v301 = vand.u32 %v297, 65535
        %v302 = vxor.u32 %v290, %v298
        %v303 = vxor.u32 %v291, %v299
        %v304 = vxor.u32 %v292, %v300
        %v305 = vxor.u32 %v293, %v301
        %v306 = vmul.u32 %v302, 2146121005
        %v307 = vmul.u32 %v303, 2146121005
        %v308 = vmul.u32 %v304, 2146121005
        %v309 = vmul.u32 %v305, 2146121005
        %v310 = vshra.s32 %v306, 15
        %v311 = vshra.s32 %v307, 15
        %v312 = vshra.s32 %v308, 15
        %v313 = vshra.s32 %v309, 15
        %v314 = vand.u32 %v310, 131071
        %v315 = vand.u32 %v311, 131071
        %v316 = vand.u32 %v312, 131071
        %v317 = vand.u32 %v313, 131071
        %v318 = vxor.u32 %v306, %v314
        %v319 = vxor.u32 %v307, %v315
        %v320 = vxor.u32 %v308, %v316
        %v321 = vxor.u32 %v309, %v317
        %v322 = vmul.u32 %v318, 2221713035
        %v323 = vmul.u32 %v319, 2221713035
        %v324 = vmul.u32 %v320, 2221713035
        %v325 = vmul.u32 %v321, 2221713035
        %v326 = vshra.s32 %v322, 16
        %v327 = vshra.s32 %v323, 16
        %v328 = vshra.s32 %v324, 16
        %v329 = vshra.s32 %v325, 16
        %v330 = vand.u32 %v326, 65535
        %v331 = vand.u32 %v327, 65535
        %v332 = vand.u32 %v328, 65535
        %v333 = vand.u32 %v329, 65535
        %v334 = vxor.u32 %v322, %v330
        %v335 = vxor.u32 %v323, %v331
        %v336 = vxor.u32 %v324, %v332
        %v337 = vxor.u32 %v325, %v333
        %v338 = vshra.s32 %v334, 8
        %v339 = vshra.s32 %v335, 8
        %v340 = vshra.s32 %v336, 8
        %v341 = vshra.s32 %v337, 8
        %v342 = vand.u32 %v338, 16777215
        %v343 = vand.u32 %v339, 16777215
        %v344 = vand.u32 %v340, 16777215
        %v345 = vand.u32 %v341, 16777215
        %vm346 = vcmp.ge.s32.totalorder %v342, 1677722
        %vm347 = vcmp.ge.s32.totalorder %v343, 1677722
        %vm348 = vcmp.ge.s32.totalorder %v344, 1677722
        %vm349 = vcmp.ge.s32.totalorder %v345, 1677722
        %v350 = vsel %vm346, 1, 0
        %v351 = vsel %vm347, 1, 0
        %v352 = vsel %vm348, 1, 0
        %v353 = vsel %vm349, 1, 0
        %v354 = vcvt.s32.f32 %v350
        %v355 = vcvt.s32.f32 %v351
        %v356 = vcvt.s32.f32 %v352
        %v357 = vcvt.s32.f32 %v353
        %v358 = vmul.f32 %v354, 1.1111112
        %v359 = vmul.f32 %v355, 1.1111112
        %v360 = vmul.f32 %v356, 1.1111112
        %v361 = vmul.f32 %v357, 1.1111112
        %v362 = vmul.f32 %v216, %v358
        %v363 = vmul.f32 %v217, %v359
        %v364 = vmul.f32 %v218, %v360
        %v365 = vmul.f32 %v219, %v361
        %366 = vst [vmem:[%s204] sm:$0xff] %v362
        %367 = vst [vmem:[%s204 + $0x8] sm:$0xff] %v363
        %368 = vst [vmem:[%s204 + $0x10] sm:$0xff] %v364
        %369 = vst [vmem:[%s204 + $0x18] sm:$0xff] %v365
        %s370 = sand.u32 %s98, 1
        %s371 = scalar_lea.sflag [#allocation6], %s370
        %s372 = sand.u32 %s98, 1
        %s373 = smul.addr %s372, 32
        %s374 = scalar_lea.vmem [#allocation9], %s373
        // Predicated region
        $region37: #{tpu_custom_call.1} parent=27 // pred_check
          %p375 = pneg %p108
        $region38: #{tpu_custom_call.1} parent=27 // pred_check_branch
          %377 = sbr.rel (%p375) target = $region40
        $region39: #{tpu_custom_call.1} parent=27 // pred_region
          %s378 = smul.u32 4, %s26
          %s380 = ssub.s32 512, 512
          %381 = vsyncadd %s371, %s380
          %s382 = smul.addr %s27, 4
          %s383 = sadd.s32 %s378, %s382
          %s384 = smul.addr %s383, 128
          %s385 = scalar_lea.hbm %s3, %s384
          %s386 = sshll.u32 %s374, 4
          %s387 = int_to_ptr.vmem [resolvable:$true] %s386
          %392 = dma.vmem_to_hbm [thread:$0]  %s387, 512, %s385, %s371, 128, 128, 8
        $region40: #{tpu_custom_call.1} parent=27 // pred_fallthru
          _
      $region28: #{tpu_custom_call.1} parent=5 // pred_fallthru
        _
      %p393 = scmp.le.s32.totalorder 2, %s17
      // Predicated region
      $region41: #{tpu_custom_call.1} parent=5 // pred_check
        %p394 = pneg %p393
      $region42: #{tpu_custom_call.1} parent=5 // pred_check_branch
        %396 = sbr.rel (%p394) target = $region44
      $region43: #{tpu_custom_call.1} parent=5 // pred_region
        %s397 = ssub.s32 %s17, 2
        // Predicated region
        $region45: #{tpu_custom_call.1} parent=43 // pred_check
          %p398 = pneg %p114
        $region46: #{tpu_custom_call.1} parent=43 // pred_check_branch
          %400 = sbr.rel (%p398) target = $region48
        $region47: #{tpu_custom_call.1} parent=43 // pred_region
          %s401 = sand.u32 %s99, 1
          %s402 = scalar_lea.sflag [#allocation6], %s401
          %s403 = sand.u32 %s99, 1
          %s404 = smul.addr %s403, 32
          %s405 = scalar_lea.vmem [#allocation9], %s404
          %406 = dma.done %s402, 512
        $region48: #{tpu_custom_call.1} parent=43 // pred_fallthru
          _
      $region44: #{tpu_custom_call.1} parent=5 // pred_fallthru
        _
    $region6: #{tpu_custom_call.1} parent=1 // loop_footer
      %s21 = sadd.s32 1, %s17
    $region7: #{tpu_custom_call.1} parent=1 // loop_footer_branch
      %16 = sbr.rel target = $region3
    $region8: #{tpu_custom_call.1} parent=1 // loop_exit
      _
    %407 = vsyncpa [#allocation5], 1
    %s408 = scalar_lea.sflag [#allocation5], 1
    %409 = vsyncpa %s408, 1
    %410 = vsyncpa [#allocation8], 1
    %411 = vsyncpa [#allocation6], 1
    %s412 = scalar_lea.sflag [#allocation6], 1
    %413 = vsyncpa %s412, 1

</llo_original>
